<compile_context>
chip_gen: v6e
topology: v6e:2x2x1
jax: 0.10.0
libtpu: 0.0.40
codegen_flags: <defaults>
</compile_context>

<pallas_src>
import functools
import math

import jax
import jax.numpy as jnp
from jax.experimental import pallas as pl
from jax.experimental.pallas import tpu as pltpu

_VMEM_LIMIT = 32 * 1024 * 1024   # above v5e's 16 MiB default scoped limit, safe on v6e/v7x


# ---------------------------------------------------------------------------
# small helpers
# ---------------------------------------------------------------------------
def _round_up(n, m):
    return ((n + m - 1) // m) * m


def _pad2d(x, rows, cols):
    r, c = x.shape
    if r == rows and c == cols:
        return x
    return jnp.pad(x, ((0, rows - r), (0, cols - c)))


def _pad_seq_feat(x, s_p, d_p):
    b, s, d = x.shape
    if s == s_p and d == d_p:
        return x
    return jnp.pad(x, ((0, 0), (0, s_p - s), (0, d_p - d)))


def _pick_row_tile(rows, cap=256):
    """rows is a multiple of 8. Return a multiple-of-8 divisor of rows (<= cap when possible),
    preferring >= 2 row tiles so both v7x TensorCores get work. Dividing exactly avoids any
    mid-block row padding copies."""
    if rows % 8 != 0:
        raise ValueError(f"rows must be a multiple of 8, got {rows}")
    cap = max(8, (cap // 8) * 8)
    divs = [d for d in range(8, rows + 1, 8) if rows % d == 0]
    in_cap = [d for d in divs if d <= cap] or [min(divs)]
    multi = [d for d in in_cap if rows // d >= 2]
    return max(multi) if multi else max(in_cap)


# ---------------------------------------------------------------------------
# 1) fused multi-output projection:  out_i = x @ W_i   (single read of x, one launch)
#    Used for [Wq|Wk|Wv] (self-attn), Wq (cross-attn query), [Wk|Wv] (cross-attn enc KV).
# ---------------------------------------------------------------------------
def fused_matmul(x2d, weights, *, row_tile=256, out_dtype=None):
    rows, d_in_p = x2d.shape                       # x2d already feature-padded to 128
    out_dtype = out_dtype or x2d.dtype
    n = len(weights)
    d_outs_p = [_round_up(w.shape[1], 128) for w in weights]   # lane-dense outputs
    w_pads = [_pad2d(w, d_in_p, dp) for w, dp in zip(weights, d_outs_p)]
    tm = _pick_row_tile(rows, row_tile)

    def kernel(x_ref, *refs):
        x = x_ref[...]
        for w_ref, o_ref in zip(refs[:n], refs[n:]):
            o_ref[...] = jnp.dot(x, w_ref[...],
                                 preferred_element_type=jnp.float32).astype(o_ref.dtype)

    return pl.pallas_call(
        kernel,
        out_shape=tuple(jax.ShapeDtypeStruct((rows, dp), out_dtype) for dp in d_outs_p),
        grid_spec=pltpu.PrefetchScalarGridSpec(
            num_scalar_prefetch=0,
            grid=(rows // tm,),
            in_specs=[pl.BlockSpec((tm, d_in_p), lambda i: (i, 0))]
                     + [pl.BlockSpec((d_in_p, dp), lambda i: (0, 0)) for dp in d_outs_p],
            out_specs=tuple(pl.BlockSpec((tm, dp), lambda i: (i, 0)) for dp in d_outs_p),
        ),
        compiler_params=pltpu.CompilerParams(
            dimension_semantics=("parallel",), vmem_limit_bytes=_VMEM_LIMIT),
    )(x2d, *w_pads)


# ---------------------------------------------------------------------------
# 2) fused:  masked multi-head attention  +  W_o projection  +  AddNorm
#    One grid step per batch element; heads are static lane-slices of the projections.
# ---------------------------------------------------------------------------
def _attn_addnorm_kernel(valid_ref, q_ref, k_ref, v_ref, res_ref, wo_ref, g_ref, bt_ref, o_ref,
                         *, H, dh, d_true, sk_true, scale, causal, kv_offset, eps):
    b = pl.program_id(0)
    q = q_ref[0]                                   # (sq_p, d_p)
    k = k_ref[0]                                   # (sk_p, d_p)
    v = v_ref[0]
    wo = wo_ref[...]                               # (d_p, d_p), resident across grid steps
    sq_p, d_p = q.shape
    sk_p = k.shape[0]

    # visibility mask built in-kernel (no HBM valid tensor): padded keys always masked
    k_pos = jax.lax.broadcasted_iota(jnp.int32, (sq_p, sk_p), 1)
    if causal:
        # d2l training mask: query row q sees keys [0, q]  (valid_len = q + 1)
        q_pos = jax.lax.broadcasted_iota(jnp.int32, (sq_p, sk_p), 0)
        visible = k_pos < (q_pos + (kv_offset + 1))
    else:
        visible = k_pos < valid_ref[b]             # per-batch valid len from SMEM
    visible = jnp.logical_and(visible, k_pos < sk_true)

    # per-head attention, accumulated directly into the W_o projection (block matmul over heads)
    proj = jnp.zeros((sq_p, d_p), jnp.float32)
    for h in range(H):                             # small static unroll
        lo = h * dh
        qh = q[:, lo:lo + dh]
        kh = k[:, lo:lo + dh]
        vh = v[:, lo:lo + dh]
        sc = jax.lax.dot_general(qh, kh, (((1,), (1,)), ((), ())),
                                 preferred_element_type=jnp.float32) * scale
        sc = jnp.where(visible, sc, -1e6)          # masked_softmax value from the reference
        m = jnp.max(sc, axis=-1, keepdims=True)
        e = jnp.exp(sc - m)
        w = e * pl.reciprocal(jnp.sum(e, axis=-1, keepdims=True), approx=True)   # EUP
        oh = jnp.dot(w.astype(vh.dtype), vh, preferred_element_type=jnp.float32)  # (sq_p, dh)
        proj = proj + jnp.dot(oh.astype(wo.dtype), wo[lo:lo + dh, :],
                              preferred_element_type=jnp.float32)

    # AddNorm: LayerNorm(residual + proj), masking padded feature lanes
    s = res_ref[0].astype(jnp.float32) + proj
    lane = jax.lax.broadcasted_iota(jnp.int32, s.shape, 1)
    real = lane < d_true
    s = jnp.where(real, s, 0.0)
    inv_d = 1.0 / d_true
    mean = jnp.sum(s, axis=-1, keepdims=True) * inv_d
    diff = jnp.where(real, s - mean, 0.0)
    var = jnp.sum(diff * diff, axis=-1, keepdims=True) * inv_d
    out = diff * jax.lax.rsqrt(var + eps) * g_ref[0].astype(jnp.float32) \
        + bt_ref[0].astype(jnp.float32)
    o_ref[0] = jnp.where(real, out, 0.0).astype(o_ref.dtype)


def attention_addnorm(valid, q, k, v, residual, wo, gamma, beta, *,
                      num_heads, d_true, sk_true, causal, kv_offset=0, eps=1e-5):
    """q/residual: (B, Sq_p, Dp); k/v: (B, Sk_p, Dp); valid: (B,) int32 (ignored if causal)."""
    B, sq_p, d_p = q.shape
    sk_p = k.shape[1]
    dh = d_true // num_heads
    wo_p = _pad2d(wo, d_p, d_p)
    g_p = _pad2d(gamma.reshape(1, -1), 1, d_p)
    b_p = _pad2d(beta.reshape(1, -1), 1, d_p)

    kernel = functools.partial(
        _attn_addnorm_kernel, H=num_heads, dh=dh, d_true=d_true, sk_true=sk_true,
        scale=1.0 / math.sqrt(dh), causal=causal, kv_offset=kv_offset, eps=eps)

    return pl.pallas_call(
        kernel,
        out_shape=jax.ShapeDtypeStruct((B, sq_p, d_p), q.dtype),
        grid_spec=pltpu.PrefetchScalarGridSpec(
            num_scalar_prefetch=1,                 # valid lens live in SMEM
            grid=(B,),
            in_specs=[
                pl.BlockSpec((1, sq_p, d_p), lambda b, vl: (b, 0, 0)),
                pl.BlockSpec((1, sk_p, d_p), lambda b, vl: (b, 0, 0)),
                pl.BlockSpec((1, sk_p, d_p), lambda b, vl: (b, 0, 0)),
                pl.BlockSpec((1, sq_p, d_p), lambda b, vl: (b, 0, 0)),
                pl.BlockSpec((d_p, d_p), lambda b, vl: (0, 0)),
                pl.BlockSpec((1, d_p), lambda b, vl: (0, 0)),
                pl.BlockSpec((1, d_p), lambda b, vl: (0, 0)),
            ],
            out_specs=pl.BlockSpec((1, sq_p, d_p), lambda b, vl: (b, 0, 0)),
        ),
        compiler_params=pltpu.CompilerParams(
            dimension_semantics=("parallel",), vmem_limit_bytes=_VMEM_LIMIT),
    )(valid, q, k, v, residual, wo_p, g_p, b_p)


# ---------------------------------------------------------------------------
# 3) fused:  PositionWiseFFN (dense1 -> ReLU -> dense2)  +  AddNorm3
#    hidden dim chunked over an 'arbitrary' axis, f32 VMEM accumulator, LN in the epilogue.
# ---------------------------------------------------------------------------
def _ffn_addnorm_kernel(x_ref, w1_ref, b1_ref, w2_ref, b2_ref, g_ref, bt_ref, o_ref, acc_ref,
                        *, d_true, eps):
    kk = pl.program_id(1)

    @pl.when(kk == 0)
    def _():
        acc_ref[...] = jnp.zeros_like(acc_ref)

    h = jnp.dot(x_ref[...], w1_ref[...], preferred_element_type=jnp.float32)
    h = jnp.maximum(h + b1_ref[...].astype(jnp.float32), 0.0)
    acc_ref[...] += jnp.dot(h.astype(w2_ref.dtype), w2_ref[...],
                            preferred_element_type=jnp.float32)

    @pl.when(kk == pl.num_programs(1) - 1)
    def _():
        # ffn(x) = acc + b2 ; AddNorm3 = LayerNorm(x + ffn(x)), padded lanes masked
        s = x_ref[...].astype(jnp.float32) + acc_ref[...] + b2_ref[...].astype(jnp.float32)
        lane = jax.lax.broadcasted_iota(jnp.int32, s.shape, 1)
        real = lane < d_true
        s = jnp.where(real, s, 0.0)
        inv_d = 1.0 / d_true
        mean = jnp.sum(s, axis=-1, keepdims=True) * inv_d
        diff = jnp.where(real, s - mean, 0.0)
        var = jnp.sum(diff * diff, axis=-1, keepdims=True) * inv_d
        out = diff * jax.lax.rsqrt(var + eps) * g_ref[...].astype(jnp.float32) \
            + bt_ref[...].astype(jnp.float32)
        o_ref[...] = jnp.where(real, out, 0.0).astype(o_ref.dtype)


def ffn_addnorm(x2d, w1, b1, w2, b2, gamma, beta, *, d_true,
                row_tile=256, hid_chunk=512, eps=1e-5):
    rows, d_p = x2d.shape
    d_hid = w1.shape[1]
    hk = min(_round_up(hid_chunk, 128), _round_up(d_hid, 128))
    d_hid_p = _round_up(d_hid, hk)
    tm = _pick_row_tile(rows, row_tile)

    w1p = _pad2d(w1, d_p, d_hid_p)
    b1p = _pad2d(b1.reshape(1, -1), 1, d_hid_p)
    w2p = _pad2d(w2, d_hid_p, d_p)
    b2p = _pad2d(b2.reshape(1, -1), 1, d_p)
    g_p = _pad2d(gamma.reshape(1, -1), 1, d_p)
    bt_p = _pad2d(beta.reshape(1, -1), 1, d_p)

    return pl.pallas_call(
        functools.partial(_ffn_addnorm_kernel, d_true=d_true, eps=eps),
        out_shape=jax.ShapeDtypeStruct((rows, d_p), x2d.dtype),
        grid_spec=pltpu.PrefetchScalarGridSpec(
            num_scalar_prefetch=0,
            grid=(rows // tm, d_hid_p // hk),
            in_specs=[
                pl.BlockSpec((tm, d_p), lambda i, kk: (i, 0)),     # x (also the residual)
                pl.BlockSpec((d_p, hk), lambda i, kk: (0, kk)),
                pl.BlockSpec((1, hk), lambda i, kk: (0, kk)),
                pl.BlockSpec((hk, d_p), lambda i, kk: (kk, 0)),
                pl.BlockSpec((1, d_p), lambda i, kk: (0, 0)),
                pl.BlockSpec((1, d_p), lambda i, kk: (0, 0)),
                pl.BlockSpec((1, d_p), lambda i, kk: (0, 0)),
            ],
            out_specs=pl.BlockSpec((tm, d_p), lambda i, kk: (i, 0)),
            scratch_shapes=[pltpu.VMEM((tm, d_p), jnp.float32)],
        ),
        compiler_params=pltpu.CompilerParams(
            dimension_semantics=("parallel", "arbitrary"), vmem_limit_bytes=_VMEM_LIMIT),
    )(x2d, w1p, b1p, w2p, b2p, g_p, bt_p)


# ---------------------------------------------------------------------------
# DecoderBlock forward (dropout == identity)
# ---------------------------------------------------------------------------
def decoder_block(X, state, params, num_heads, block_i, *, training=True,
                  row_tile=256, hid_chunk=512):
    enc_outputs, enc_valid_lens, kv_cache = state
    B, S, D = X.shape
    H = num_heads
    Dp = _round_up(D, 128)
    Sp = _round_up(S, 8)

    cache = kv_cache[block_i]
    key_values = X if cache is None else jnp.concatenate([cache, X], axis=1)
    kv_cache = list(kv_cache)
    kv_cache[block_i] = key_values

    Skv = key_values.shape[1]
    Skv_p = _round_up(Skv, 8)
    S_enc = enc_outputs.shape[1]
    S_enc_p = _round_up(S_enc, 8)

    p = params
    # pad activations ONCE at entry; everything downstream stays in padded layout
    Xp = _pad_seq_feat(X, Sp, Dp)
    encp = _pad_seq_feat(enc_outputs, S_enc_p, Dp)

    # ---- self-attention: fused Q/K/V projection (X read once) ----
    x2d = Xp.reshape(B * Sp, Dp)
    if cache is None:
        q2d, k2d, v2d = fused_matmul(x2d, (p["Wq1"], p["Wk1"], p["Wv1"]), row_tile=row_tile)
        kvs_p = Sp
    else:
        kvp = _pad_seq_feat(key_values, Skv_p, Dp)
        (q2d,) = fused_matmul(x2d, (p["Wq1"],), row_tile=row_tile)
        k2d, v2d = fused_matmul(kvp.reshape(B * Skv_p, Dp), (p["Wk1"], p["Wv1"]),
                                row_tile=row_tile)
        kvs_p = Skv_p

    if training:
        valid_dec = jnp.zeros((B,), jnp.int32)     # unused when causal
        causal = True
    else:
        valid_dec = jnp.full((B,), Skv, jnp.int32)  # d2l: no mask at inference
        causal = False

    Y = attention_addnorm(
        valid_dec,
        q2d.reshape(B, Sp, Dp), k2d.reshape(B, kvs_p, Dp), v2d.reshape(B, kvs_p, Dp),
        Xp, p["Wo1"], p["g1"], p["b1"],
        num_heads=H, d_true=D, sk_true=Skv, causal=causal)

    # ---- cross-attention ----
    (qc,) = fused_matmul(Y.reshape(B * Sp, Dp), (p["Wq2"],), row_tile=row_tile)
    kc, vc = fused_matmul(encp.reshape(B * S_enc_p, Dp), (p["Wk2"], p["Wv2"]),
                          row_tile=row_tile)
    if enc_valid_lens is None:
        valid_enc = jnp.full((B,), S_enc, jnp.int32)
    else:
        valid_enc = enc_valid_lens.astype(jnp.int32).reshape(B)

    Z = attention_addnorm(
        valid_enc,
        qc.reshape(B, Sp, Dp), kc.reshape(B, S_enc_p, Dp), vc.reshape(B, S_enc_p, Dp),
        Y, p["Wo2"], p["g2"], p["b2"],
        num_heads=H, d_true=D, sk_true=S_enc, causal=False)

    # ---- FFN + AddNorm3 (fused) ----
    out2d = ffn_addnorm(Z.reshape(B * Sp, Dp), p["W1"], p["bb1"], p["W2"], p["bb2"],
                        p["g3"], p["b3"], d_true=D, row_tile=row_tile, hid_chunk=hid_chunk)
    out = out2d.reshape(B, Sp, Dp)[:, :S, :D]      # slice once at exit
    return out, (enc_outputs, enc_valid_lens, kv_cache)


# ---------------------------------------------------------------------------
# pure-JAX reference (mirrors the PyTorch module with dropout = 0)
# ---------------------------------------------------------------------------
def _ref_masked_softmax(scores, valid_bh):
    if valid_bh is None:
        return jax.nn.softmax(scores, axis=-1)
    sk = scores.shape[-1]
    mask = jnp.arange(sk)[None, None, :] < valid_bh[:, :, None]
    return jax.nn.softmax(jnp.where(mask, scores, -1e6), axis=-1)


def _ref_mha(queries, keys, values, valid, Wq, Wk, Wv, Wo, num_heads):
    B, Sq, D = queries.shape
    Sk = keys.shape[1]
    H = num_heads
    dh = D // H

    def split(x, S):
        return x.reshape(B, S, H, dh).transpose(0, 2, 1, 3).reshape(B * H, S, dh)

    q, k, v = split(queries @ Wq, Sq), split(keys @ Wk, Sk), split(values @ Wv, Sk)
    scores = jnp.einsum("bqd,bkd->bqk", q, k) / math.sqrt(dh)
    valid_bh = None if valid is None else jnp.repeat(valid, H, axis=0)
    w = _ref_masked_softmax(scores, valid_bh)
    out = jnp.einsum("bqk,bkd->bqd", w, v)
    out = out.reshape(B, H, Sq, dh).transpose(0, 2, 1, 3).reshape(B, Sq, D)
    return out @ Wo


def _ref_layer_norm(x, g, b, eps=1e-5):
    mean = x.mean(-1, keepdims=True)
    var = ((x - mean) ** 2).mean(-1, keepdims=True)
    return (x - mean) / jnp.sqrt(var + eps) * g + b


def ref_decoder_block(X, key_values, enc_outputs, enc_valid_lens, params, num_heads,
                      *, training=True):
    B, S, D = X.shape
    dec_valid = (jnp.tile(jnp.arange(1, S + 1)[None, :], (B, 1)) if training else None)
    p = params
    X2 = _ref_mha(X, key_values, key_values, dec_valid,
                  p["Wq1"], p["Wk1"], p["Wv1"], p["Wo1"], num_heads)
    Y = _ref_layer_norm(X + X2, p["g1"], p["b1"])
    enc_valid = None if enc_valid_lens is None else jnp.tile(enc_valid_lens[:, None], (1, S))
    Y2 = _ref_mha(Y, enc_outputs, enc_outputs, enc_valid,
                  p["Wq2"], p["Wk2"], p["Wv2"], p["Wo2"], num_heads)
    Z = _ref_layer_norm(Y + Y2, p["g2"], p["b2"])
    ffn = jnp.maximum(Z @ p["W1"] + p["bb1"], 0.0) @ p["W2"] + p["bb2"]
    return _ref_layer_norm(Z + ffn, p["g3"], p["b3"])


# ---------------------------------------------------------------------------
# parameter init (weights stored (in, out) == transpose of PyTorch's (out, in))
# ---------------------------------------------------------------------------
def init_decoder_block_params(key, num_hiddens, ffn_num_hiddens, dtype=jnp.float32):
    keys = jax.random.split(key, 12)
    D = num_hiddens

    def w_init(k, d_in, d_out):
        bound = 1.0 / (d_in ** 0.5)
        return jax.random.uniform(k, (d_in, d_out), dtype, -bound, bound)

    def b_init(k, d_in, d_out):
        bound = 1.0 / (d_in ** 0.5)
        return jax.random.uniform(k, (d_out,), dtype, -bound, bound)

    return {
        "Wq1": w_init(keys[0], D, D), "Wk1": w_init(keys[1], D, D),
        "Wv1": w_init(keys[2], D, D), "Wo1": w_init(keys[3], D, D),
        "Wq2": w_init(keys[4], D, D), "Wk2": w_init(keys[5], D, D),
        "Wv2": w_init(keys[6], D, D), "Wo2": w_init(keys[7], D, D),
        "W1": w_init(keys[8], D, ffn_num_hiddens),
        "bb1": b_init(keys[9], D, ffn_num_hiddens),
        "W2": w_init(keys[10], ffn_num_hiddens, D),
        "bb2": b_init(keys[11], ffn_num_hiddens, D),
        "g1": jnp.ones((D,), dtype), "b1": jnp.zeros((D,), dtype),
        "g2": jnp.ones((D,), dtype), "b2": jnp.zeros((D,), dtype),
        "g3": jnp.ones((D,), dtype), "b3": jnp.zeros((D,), dtype),
    }


# ---------------------------------------------------------------------------
if __name__ == "__main__":
    key = jax.random.PRNGKey(0)
    kx, ke, kp, kd = jax.random.split(key, 4)

    # DecoderBlock(key/query/value_size=32, num_hiddens=32, norm_shape=[32],
    #              ffn_num_input=32, ffn_num_hiddens=64, num_heads=4, dropout=0.0, i=0)
    batch, num_steps, enc_steps = 2, 8, 10
    num_hiddens, num_heads, ffn_num_hiddens = 32, 4, 64

    X = jax.random.normal(kx, (batch, num_steps, num_hiddens), jnp.float32)
    enc_outputs = jax.random.normal(ke, (batch, enc_steps, num_hiddens), jnp.float32)
    enc_valid_lens = jnp.array([7, 10], dtype=jnp.int32)
    params = init_decoder_block_params(kp, num_hiddens, ffn_num_hiddens)

    # --- training-mode call (causal mask, cache starts empty) ---
    state = (enc_outputs, enc_valid_lens, [None])
    out, new_state = decoder_block(X, state, params, num_heads, block_i=0, training=True)
    out = jax.block_until_ready(out)
    ref = ref_decoder_block(X, X, enc_outputs, enc_valid_lens, params, num_heads, training=True)

    assert out.shape == (batch, num_steps, num_hiddens)
    assert new_state[2][0].shape == (batch, num_steps, num_hiddens)
    # Tolerance covers the chained f32 MXU accumulation differences plus the EUP
    # approximate-reciprocal softmax normalization (feedback: pl.reciprocal(approx=True)).
    err = float(jnp.max(jnp.abs(out - ref)))
    assert jnp.allclose(out, ref, atol=3e-3, rtol=3e-3), err

    # --- inference-mode single-token decode step with a KV cache (no causal mask) ---
    X_step = jax.random.normal(kd, (batch, 1, num_hiddens), jnp.float32)
    state_dec = (enc_outputs, enc_valid_lens, [X])          # previous tokens cached
    out_dec, state_dec2 = decoder_block(X_step, state_dec, params, num_heads,
                                        block_i=0, training=False)
    out_dec = jax.block_until_ready(out_dec)
    kv_ref = jnp.concatenate([X, X_step], axis=1)
    ref_dec = ref_decoder_block(X_step, kv_ref, enc_outputs, enc_valid_lens, params,
                                num_heads, training=False)
    assert out_dec.shape == (batch, 1, num_hiddens)
    assert state_dec2[2][0].shape == (batch, num_steps + 1, num_hiddens)
    err_dec = float(jnp.max(jnp.abs(out_dec - ref_dec)))
    assert jnp.allclose(out_dec, ref_dec, atol=3e-3, rtol=3e-3), err_dec

    print("KERNEL_OK")
</pallas_src>

<mosaic_0001>
module attributes {stable_mosaic.version = 11 : i64} {
  func.func @kernel(%arg0: i32, %arg1: memref<8x128xf32, #tpu.memory_space<vmem>>, %arg2: memref<128x128xf32, #tpu.memory_space<vmem>>, %arg3: memref<128x128xf32, #tpu.memory_space<vmem>>, %arg4: memref<128x128xf32, #tpu.memory_space<vmem>>, %arg5: memref<8x128xf32, #tpu.memory_space<vmem>>, %arg6: memref<8x128xf32, #tpu.memory_space<vmem>>, %arg7: memref<8x128xf32, #tpu.memory_space<vmem>>) attributes {dimension_semantics = [#tpu.dimension_semantics<parallel>], iteration_bounds = array<i64: 2>, scalar_prefetch = 0 : i64, scratch_operands = 0 : i64, tpu.core_type = #tpu.core_type<tc>, window_params = [{transform_indices = @transform_0, window_bounds = array<i64: 8, 128>}, {pipeline_mode = #tpu.pipeline_mode<synchronous>, transform_indices = @transform_1, window_bounds = array<i64: 128, 128>}, {pipeline_mode = #tpu.pipeline_mode<synchronous>, transform_indices = @transform_2, window_bounds = array<i64: 128, 128>}, {pipeline_mode = #tpu.pipeline_mode<synchronous>, transform_indices = @transform_3, window_bounds = array<i64: 128, 128>}, {transform_indices = @transform_4, window_bounds = array<i64: 8, 128>}, {transform_indices = @transform_5, window_bounds = array<i64: 8, 128>}, {transform_indices = @transform_6, window_bounds = array<i64: 8, 128>}]} {
    %c0 = arith.constant 0 : index
    %c0_0 = arith.constant 0 : index
    %0 = vector.load %arg1[%c0, %c0_0] : memref<8x128xf32, #tpu.memory_space<vmem>>, vector<8x128xf32>
    %c0_1 = arith.constant 0 : index
    %c0_2 = arith.constant 0 : index
    %1 = vector.load %arg2[%c0_1, %c0_2] : memref<128x128xf32, #tpu.memory_space<vmem>>, vector<128x128xf32>
    %cst = arith.constant dense<0.000000e+00> : vector<8x128xf32>
    %2 = tpu.matmul %0, %1, %cst {dimension_numbers = #tpu.dot_dimension_numbers<[1], [0], [0], [1], [0, 0, 1, 1], [], []>} : vector<8x128xf32>, vector<128x128xf32>, vector<8x128xf32> -> vector<8x128xf32>
    %c0_3 = arith.constant 0 : index
    %c0_4 = arith.constant 0 : index
    %3 = vector.load %arg5[%c0_3, %c0_4] : memref<8x128xf32, #tpu.memory_space<vmem>>, vector<8x128xf32>
    tpu.vector_store %arg5[%c0_3, %c0_4], %2 {strides = array<i32>} : memref<8x128xf32, #tpu.memory_space<vmem>>, vector<8x128xf32>,
    %c0_5 = arith.constant 0 : index
    %c0_6 = arith.constant 0 : index
    %4 = vector.load %arg3[%c0_5, %c0_6] : memref<128x128xf32, #tpu.memory_space<vmem>>, vector<128x128xf32>
    %cst_7 = arith.constant dense<0.000000e+00> : vector<8x128xf32>
    %5 = tpu.matmul %0, %4, %cst_7 {dimension_numbers = #tpu.dot_dimension_numbers<[1], [0], [0], [1], [0, 0, 1, 1], [], []>} : vector<8x128xf32>, vector<128x128xf32>, vector<8x128xf32> -> vector<8x128xf32>
    %c0_8 = arith.constant 0 : index
    %c0_9 = arith.constant 0 : index
    %6 = vector.load %arg6[%c0_8, %c0_9] : memref<8x128xf32, #tpu.memory_space<vmem>>, vector<8x128xf32>
    tpu.vector_store %arg6[%c0_8, %c0_9], %5 {strides = array<i32>} : memref<8x128xf32, #tpu.memory_space<vmem>>, vector<8x128xf32>,
    %c0_10 = arith.constant 0 : index
    %c0_11 = arith.constant 0 : index
    %7 = vector.load %arg4[%c0_10, %c0_11] : memref<128x128xf32, #tpu.memory_space<vmem>>, vector<128x128xf32>
    %cst_12 = arith.constant dense<0.000000e+00> : vector<8x128xf32>
    %8 = tpu.matmul %0, %7, %cst_12 {dimension_numbers = #tpu.dot_dimension_numbers<[1], [0], [0], [1], [0, 0, 1, 1], [], []>} : vector<8x128xf32>, vector<128x128xf32>, vector<8x128xf32> -> vector<8x128xf32>
    %c0_13 = arith.constant 0 : index
    %c0_14 = arith.constant 0 : index
    %9 = vector.load %arg7[%c0_13, %c0_14] : memref<8x128xf32, #tpu.memory_space<vmem>>, vector<8x128xf32>
    tpu.vector_store %arg7[%c0_13, %c0_14], %8 {strides = array<i32>} : memref<8x128xf32, #tpu.memory_space<vmem>>, vector<8x128xf32>,
    return
  }
  func.func @transform_0(%arg0: i32) -> (i32, i32) {
    %c0_i32 = arith.constant 0 : i32
    %c0_i32_0 = arith.constant 0 : i32
    return %arg0, %c0_i32 : i32, i32
  }
  func.func @transform_1(%arg0: i32) -> (i32, i32) {
    %c0_i32 = arith.constant 0 : i32
    %c0_i32_0 = arith.constant 0 : i32
    %c0_i32_1 = arith.constant 0 : i32
    return %c0_i32, %c0_i32_0 : i32, i32
  }
  func.func @transform_2(%arg0: i32) -> (i32, i32) {
    %c0_i32 = arith.constant 0 : i32
    %c0_i32_0 = arith.constant 0 : i32
    %c0_i32_1 = arith.constant 0 : i32
    return %c0_i32, %c0_i32_0 : i32, i32
  }
  func.func @transform_3(%arg0: i32) -> (i32, i32) {
    %c0_i32 = arith.constant 0 : i32
    %c0_i32_0 = arith.constant 0 : i32
    %c0_i32_1 = arith.constant 0 : i32
    return %c0_i32, %c0_i32_0 : i32, i32
  }
  func.func @transform_4(%arg0: i32) -> (i32, i32) {
    %c0_i32 = arith.constant 0 : i32
    %c0_i32_0 = arith.constant 0 : i32
    return %arg0, %c0_i32 : i32, i32
  }
  func.func @transform_5(%arg0: i32) -> (i32, i32) {
    %c0_i32 = arith.constant 0 : i32
    %c0_i32_0 = arith.constant 0 : i32
    return %arg0, %c0_i32 : i32, i32
  }
  func.func @transform_6(%arg0: i32) -> (i32, i32) {
    %c0_i32 = arith.constant 0 : i32
    %c0_i32_0 = arith.constant 0 : i32
    return %arg0, %c0_i32 : i32, i32
  }
}

</mosaic_0001>

<llo_original>
// kernel: tpu_custom_call.1
$region0: #{tpu_custom_call.1}
  #allocation0 [shape = 'u32[]', space=smem, size = 0x4, offset = 0x4, fixed_abs, tag = 'smem constant byte address 0x4 - core index']
  #allocation1 [shape = 'u32[144,128]{1,0:T(1,128)}', space=vmem, size = 0x12000, scoped, tag = 'internal scratch']
  %s0 = inlined_call_operand.hbm [shape: f32[16,128], index: 0, kind: input, shape index: {}]
  %s1 = inlined_call_operand.hbm [shape: f32[128,128], index: 1, kind: input, shape index: {}]
  %s2 = inlined_call_operand.hbm [shape: f32[128,128], index: 2, kind: input, shape index: {}]
  %s3 = inlined_call_operand.hbm [shape: f32[128,128], index: 3, kind: input, shape index: {}]
  %s4 = inlined_call_operand.hbm [shape: f32[16,128], index: 4, kind: output, shape index: {0}]
  %s5 = inlined_call_operand.hbm [shape: f32[16,128], index: 5, kind: output, shape index: {1}]
  %s6 = inlined_call_operand.hbm [shape: f32[16,128], index: 6, kind: output, shape index: {2}]
  %7 = xla_tuple %s4, %s5, %s6
  %s8 = sld [smem:[#allocation0]]
  $region81: #{tpu_custom_call.1} parent=0
    _
  %s10 = ssub.s32 1, %s8
  %s11 = scalar_select 0, %s10, %s8
  $region1: #{tpu_custom_call.1} parent=0
    #allocation2 [shape = 'u8[8192]{0}', space=vmem, size = 0x2000, scoped, tag = 'input window, operand 0']
    #allocation3 [shape = 's32[2]{0}', space=sflag, size = 0x8, scoped, tag = 'scoped memory for tpu_custom_call.1']
    #allocation4 [shape = 's32[2]{0}', space=sflag, size = 0x8, scoped, tag = 'scoped memory for tpu_custom_call.1']
    #allocation5 [shape = 'u8[65536]{0}', space=vmem, size = 0x10000, scoped, tag = 'input window, operand 1, single buffered']
    #allocation6 [shape = 's32[1]{0}', space=sflag, size = 0x4, scoped, tag = 'scoped memory for tpu_custom_call.1']
    #allocation7 [shape = 'u8[65536]{0}', space=vmem, size = 0x10000, scoped, tag = 'input window, operand 2, single buffered']
    #allocation8 [shape = 'u8[65536]{0}', space=vmem, size = 0x10000, scoped, tag = 'input window, operand 3, single buffered']
    #allocation9 [shape = 's32[1]{0}', space=sflag, size = 0x4, scoped, tag = 'scoped memory for tpu_custom_call.1']
    #allocation10 [shape = 'u8[8192]{0}', space=vmem, size = 0x2000, scoped, tag = 'output window, operand 0']
    #allocation11 [shape = 'u8[8192]{0}', space=vmem, size = 0x2000, scoped, tag = 'output window, operand 1']
    #allocation12 [shape = 's32[2]{0}', space=sflag, size = 0x8, scoped, tag = 'scoped memory for tpu_custom_call.1']
    #allocation13 [shape = 'u8[8192]{0}', space=vmem, size = 0x2000, scoped, tag = 'output window, operand 2']
    %12 = vsyncpa [#allocation3], 0
    %s13 = scalar_lea.sflag [#allocation3], 1
    %14 = vsyncpa %s13, 0
    %15 = vsyncpa [#allocation6], 0
    %16 = vsyncpa [#allocation9], 0
    %17 = vsyncpa [#allocation4], 0
    %s18 = scalar_lea.sflag [#allocation4], 1
    %19 = vsyncpa %s18, 0
    %20 = vsyncpa [#allocation12], 0
    %s21 = scalar_lea.sflag [#allocation12], 1
    %22 = vsyncpa %s21, 0
    loop: start=0, step=1, limit=4
    $region2: #{tpu_custom_call.1} parent=1 // loop_pre_header
      _
    $region3: #{tpu_custom_call.1} parent=1 // loop_header
      %s24 = sphi 0, %s28
      %p25 = scmp.ge.s32.totalorder %s24, 4
      %s34 = sphi 0, %s36
      %s37 = sphi 0, %s34
      %s38 = sphi 0, %s37
      %s54 = sphi 0, %s38
      %s58 = sphi 0, %s58
      %s60 = sphi 0, %s58
      %s61 = sphi 0, %s60
      %s75 = sphi 0, %s61
      %s79 = sphi 0, %s79
      %s81 = sphi 0, %s79
      %s82 = sphi 0, %s81
      %s96 = sphi 0, %s82
      %s100 = sphi 0, %s100
      %s102 = sphi 0, %s100
      %s103 = sphi 0, %s102
      %s117 = sphi 0, %s103
      %s123 = sphi 0, %s125
      %s126 = sphi 0, %s123
      %s127 = sphi 0, %s126
      %s143 = sphi 0, %s127
      %s149 = sphi 0, %s151
      %s152 = sphi 0, %s149
      %s153 = sphi 0, %s152
      %s169 = sphi 0, %s153
      %s175 = sphi 0, %s177
      %s178 = sphi 0, %s175
      %s179 = sphi 0, %s178
      %s195 = sphi 0, %s179
    $region4: #{tpu_custom_call.1} parent=1 // loop_header_branch
      %27 = sbr.rel (%p25) target = $region8
    $region5: #{tpu_custom_call.1} parent=1 // loop_body
      %s29 = ssub.s32 %s24, 1
      %s30 = ssub.s32 %s24, 2
      %s31 = sadd.s32 %s24, 1
      %s32 = ssub.s32 %s24, %s31
      %p33 = scmp.eq.s32.totalorder %s32, 0
      %s35 = sadd.s32 %s34, 1
      %s36 = scalar_select %p33, %s34, %s35
      %p39 = pneg %p33
      %p40 = scmp.eq.s32.totalorder %s24, 1
      %p41 = por %p39, %p40
      %p42 = scmp.ne.s32.totalorder %s34, %s37
      %p43 = scmp.eq.s32.totalorder %s24, 0
      %p44 = por %p42, %p43
      %p45 = scmp.ne.s32.totalorder %s34, %s37
      %p46 = scmp.eq.s32.totalorder %s29, 1
      %p47 = por %p45, %p46
      %p48 = scmp.ne.s32.totalorder %s37, %s38
      %p49 = scmp.eq.s32.totalorder %s29, 0
      %p50 = por %p48, %p49
      %p51 = scmp.ne.s32.totalorder %s37, %s38
      %p52 = scmp.eq.s32.totalorder %s30, 1
      %p53 = por %p51, %p52
      %p55 = scmp.ne.s32.totalorder %s38, %s54
      %p56 = scmp.eq.s32.totalorder %s30, 0
      %p57 = por %p55, %p56
      %s59 = sadd.s32 %s58, 1
      %p62 = scmp.eq.s32.totalorder %s24, 1
      %p63 = scmp.ne.s32.totalorder %s58, %s60
      %p64 = scmp.eq.s32.totalorder %s24, 0
      %p65 = por %p63, %p64
      %p66 = scmp.ne.s32.totalorder %s58, %s60
      %p67 = scmp.eq.s32.totalorder %s29, 1
      %p68 = por %p66, %p67
      %p69 = scmp.ne.s32.totalorder %s60, %s61
      %p70 = scmp.eq.s32.totalorder %s29, 0
      %p71 = por %p69, %p70
      %p72 = scmp.ne.s32.totalorder %s60, %s61
      %p73 = scmp.eq.s32.totalorder %s30, 1
      %p74 = por %p72, %p73
      %p76 = scmp.ne.s32.totalorder %s61, %s75
      %p77 = scmp.eq.s32.totalorder %s30, 0
      %p78 = por %p76, %p77
      %s80 = sadd.s32 %s79, 1
      %p83 = scmp.eq.s32.totalorder %s24, 1
      %p84 = scmp.ne.s32.totalorder %s79, %s81
      %p85 = scmp.eq.s32.totalorder %s24, 0
      %p86 = por %p84, %p85
      %p87 = scmp.ne.s32.totalorder %s79, %s81
      %p88 = scmp.eq.s32.totalorder %s29, 1
      %p89 = por %p87, %p88
      %p90 = scmp.ne.s32.totalorder %s81, %s82
      %p91 = scmp.eq.s32.totalorder %s29, 0
      %p92 = por %p90, %p91
      %p93 = scmp.ne.s32.totalorder %s81, %s82
      %p94 = scmp.eq.s32.totalorder %s30, 1
      %p95 = por %p93, %p94
      %p97 = scmp.ne.s32.totalorder %s82, %s96
      %p98 = scmp.eq.s32.totalorder %s30, 0
      %p99 = por %p97, %p98
      %s101 = sadd.s32 %s100, 1
      %p104 = scmp.eq.s32.totalorder %s24, 1
      %p105 = scmp.ne.s32.totalorder %s100, %s102
      %p106 = scmp.eq.s32.totalorder %s24, 0
      %p107 = por %p105, %p106
      %p108 = scmp.ne.s32.totalorder %s100, %s102
      %p109 = scmp.eq.s32.totalorder %s29, 1
      %p110 = por %p108, %p109
      %p111 = scmp.ne.s32.totalorder %s102, %s103
      %p112 = scmp.eq.s32.totalorder %s29, 0
      %p113 = por %p111, %p112
      %p114 = scmp.ne.s32.totalorder %s102, %s103
      %p115 = scmp.eq.s32.totalorder %s30, 1
      %p116 = por %p114, %p115
      %p118 = scmp.ne.s32.totalorder %s103, %s117
      %p119 = scmp.eq.s32.totalorder %s30, 0
      %p120 = por %p118, %p119
      %s121 = ssub.s32 %s24, %s31
      %p122 = scmp.eq.s32.totalorder %s121, 0
      %s124 = sadd.s32 %s123, 1
      %s125 = scalar_select %p122, %s123, %s124
      %p128 = pneg %p122
      %p129 = scmp.eq.s32.totalorder %s24, 1
      %p130 = por %p128, %p129
      %p131 = scmp.ne.s32.totalorder %s123, %s126
      %p132 = scmp.eq.s32.totalorder %s24, 0
      %p133 = por %p131, %p132
      %p134 = scmp.ne.s32.totalorder %s123, %s126
      %p135 = scmp.eq.s32.totalorder %s29, 1
      %p136 = por %p134, %p135
      %p137 = scmp.ne.s32.totalorder %s126, %s127
      %p138 = scmp.eq.s32.totalorder %s29, 0
      %p139 = por %p137, %p138
      %p140 = scmp.ne.s32.totalorder %s126, %s127
      %p141 = scmp.eq.s32.totalorder %s30, 1
      %p142 = por %p140, %p141
      %p144 = scmp.ne.s32.totalorder %s127, %s143
      %p145 = scmp.eq.s32.totalorder %s30, 0
      %p146 = por %p144, %p145
      %s147 = ssub.s32 %s24, %s31
      %p148 = scmp.eq.s32.totalorder %s147, 0
      %s150 = sadd.s32 %s149, 1
      %s151 = scalar_select %p148, %s149, %s150
      %p154 = pneg %p148
      %p155 = scmp.eq.s32.totalorder %s24, 1
      %p156 = por %p154, %p155
      %p157 = scmp.ne.s32.totalorder %s149, %s152
      %p158 = scmp.eq.s32.totalorder %s24, 0
      %p159 = por %p157, %p158
      %p160 = scmp.ne.s32.totalorder %s149, %s152
      %p161 = scmp.eq.s32.totalorder %s29, 1
      %p162 = por %p160, %p161
      %p163 = scmp.ne.s32.totalorder %s152, %s153
      %p164 = scmp.eq.s32.totalorder %s29, 0
      %p165 = por %p163, %p164
      %p166 = scmp.ne.s32.totalorder %s152, %s153
      %p167 = scmp.eq.s32.totalorder %s30, 1
      %p168 = por %p166, %p167
      %p170 = scmp.ne.s32.totalorder %s153, %s169
      %p171 = scmp.eq.s32.totalorder %s30, 0
      %p172 = por %p170, %p171
      %s173 = ssub.s32 %s24, %s31
      %p174 = scmp.eq.s32.totalorder %s173, 0
      %s176 = sadd.s32 %s175, 1
      %s177 = scalar_select %p174, %s175, %s176
      %p180 = pneg %p174
      %p181 = scmp.eq.s32.totalorder %s24, 1
      %p182 = por %p180, %p181
      %p183 = scmp.ne.s32.totalorder %s175, %s178
      %p184 = scmp.eq.s32.totalorder %s24, 0
      %p185 = por %p183, %p184
      %p186 = scmp.ne.s32.totalorder %s175, %s178
      %p187 = scmp.eq.s32.totalorder %s29, 1
      %p188 = por %p186, %p187
      %p189 = scmp.ne.s32.totalorder %s178, %s179
      %p190 = scmp.eq.s32.totalorder %s29, 0
      %p191 = por %p189, %p190
      %p192 = scmp.ne.s32.totalorder %s178, %s179
      %p193 = scmp.eq.s32.totalorder %s30, 1
      %p194 = por %p192, %p193
      %p196 = scmp.ne.s32.totalorder %s179, %s195
      %p197 = scmp.eq.s32.totalorder %s30, 0
      %p198 = por %p196, %p197
      %p199 = scmp.le.s32.totalorder 1, %s24
      %p200 = scmp.lt.s32.totalorder %s24, 3
      %p201 = pnand %p199, %p200
      %p202 = pneg %p201
      // Predicated region
      $region9: #{tpu_custom_call.1} parent=5 // pred_check
        _
      $region10: #{tpu_custom_call.1} parent=5 // pred_check_branch
        %204 = sbr.rel (%p201) target = $region12
      $region11: #{tpu_custom_call.1} parent=5 // pred_region
        %s205 = ssub.s32 %s24, 1
        // Predicated region
        $region13: #{tpu_custom_call.1} parent=11 // pred_check
          %p206 = pneg %p71
        $region14: #{tpu_custom_call.1} parent=11 // pred_check_branch
          %208 = sbr.rel (%p206) target = $region16
        $region15: #{tpu_custom_call.1} parent=11 // pred_region
          %s210 = ssub.s32 2048, 2048
          %211 = vsyncadd [#allocation6], %s210
          %s212 = sshll.u32 [#allocation5], 4
          %s213 = int_to_ptr.vmem [resolvable:$true] %s212
          %218 = dma.hbm_to_vmem [thread:$0]  %s1, 2048, %s213, [#allocation6], 128, 128, 8
        $region16: #{tpu_custom_call.1} parent=11 // pred_fallthru
          _
        // Predicated region
        $region17: #{tpu_custom_call.1} parent=11 // pred_check
          %p219 = pneg %p92
        $region18: #{tpu_custom_call.1} parent=11 // pred_check_branch
          %221 = sbr.rel (%p219) target = $region20
        $region19: #{tpu_custom_call.1} parent=11 // pred_region
          %s223 = ssub.s32 2048, 2048
          %224 = vsyncadd [#allocation6], %s223
          %s225 = sshll.u32 [#allocation7], 4
          %s226 = int_to_ptr.vmem [resolvable:$true] %s225
          %231 = dma.hbm_to_vmem [thread:$0]  %s2, 2048, %s226, [#allocation6], 128, 128, 8
        $region20: #{tpu_custom_call.1} parent=11 // pred_fallthru
          _
        // Predicated region
        $region21: #{tpu_custom_call.1} parent=11 // pred_check
          %p232 = pneg %p113
        $region22: #{tpu_custom_call.1} parent=11 // pred_check_branch
          %234 = sbr.rel (%p232) target = $region24
        $region23: #{tpu_custom_call.1} parent=11 // pred_region
          %s236 = ssub.s32 2048, 2048
          %237 = vsyncadd [#allocation9], %s236
          %s238 = sshll.u32 [#allocation8], 4
          %s239 = int_to_ptr.vmem [resolvable:$true] %s238
          %244 = dma.hbm_to_vmem [thread:$0]  %s3, 2048, %s239, [#allocation9], 128, 128, 8
        $region24: #{tpu_custom_call.1} parent=11 // pred_fallthru
          _
      $region12: #{tpu_custom_call.1} parent=5 // pred_fallthru
        _
      %p245 = scmp.lt.s32.totalorder %s24, 2
      // Predicated region
      $region25: #{tpu_custom_call.1} parent=5 // pred_check
        %p246 = pneg %p245
      $region26: #{tpu_custom_call.1} parent=5 // pred_check_branch
        %248 = sbr.rel (%p246) target = $region28
      $region27: #{tpu_custom_call.1} parent=5 // pred_region
        // Predicated region
        $region29: #{tpu_custom_call.1} parent=27 // pred_check
          %p249 = pneg %p44
        $region30: #{tpu_custom_call.1} parent=27 // pred_check_branch
          %251 = sbr.rel (%p249) target = $region32
        $region31: #{tpu_custom_call.1} parent=27 // pred_region
          %s252 = sand.u32 %s34, 1
          %s253 = scalar_lea.sflag [#allocation3], %s252
          %s254 = sand.u32 %s34, 1
          %s255 = smul.addr %s254, 8
          %s256 = scalar_lea.vmem [#allocation2], %s255
          %s258 = ssub.s32 128, 128
          %259 = vsyncadd %s253, %s258
          %s260 = smul.addr %s24, 128
          %s261 = scalar_lea.hbm %s0, %s260
          %s263 = sshll.u32 %s256, 4
          %s264 = int_to_ptr.vmem [resolvable:$true] %s263
          %266 = dma.hbm_to_vmem [thread:$0]  %s261, 128, %s264, %s253
        $region32: #{tpu_custom_call.1} parent=27 // pred_fallthru
          _
      $region28: #{tpu_custom_call.1} parent=5 // pred_fallthru
        _
      %p267 = scmp.le.s32.totalorder 1, %s24
      %p268 = scmp.lt.s32.totalorder %s24, 3
      %p269 = pnand %p267, %p268
      %p270 = pneg %p269
      // Predicated region
      $region33: #{tpu_custom_call.1} parent=5 // pred_check
        _
      $region34: #{tpu_custom_call.1} parent=5 // pred_check_branch
        %272 = sbr.rel (%p269) target = $region36
      $region35: #{tpu_custom_call.1} parent=5 // pred_region
        %s273 = ssub.s32 %s24, 1
        %s274 = sand.u32 %s37, 1
        %s275 = scalar_lea.sflag [#allocation3], %s274
        %s276 = sand.u32 %s37, 1
        %s277 = smul.addr %s276, 8
        %s278 = scalar_lea.vmem [#allocation2], %s277
        // Predicated region
        $region37: #{tpu_custom_call.1} parent=35 // pred_check
          %p279 = pneg %p50
        $region38: #{tpu_custom_call.1} parent=35 // pred_check_branch
          %281 = sbr.rel (%p279) target = $region40
        $region39: #{tpu_custom_call.1} parent=35 // pred_region
          %282 = dma.done %s275, 128
        $region40: #{tpu_custom_call.1} parent=35 // pred_fallthru
          _
        // Predicated region
        $region41: #{tpu_custom_call.1} parent=35 // pred_check
          %p283 = pneg %p71
        $region42: #{tpu_custom_call.1} parent=35 // pred_check_branch
          %285 = sbr.rel (%p283) target = $region44
        $region43: #{tpu_custom_call.1} parent=35 // pred_region
          %286 = dma.done [#allocation6], 2048
        $region44: #{tpu_custom_call.1} parent=35 // pred_fallthru
          _
        // Predicated region
        $region45: #{tpu_custom_call.1} parent=35 // pred_check
          %p287 = pneg %p92
        $region46: #{tpu_custom_call.1} parent=35 // pred_check_branch
          %289 = sbr.rel (%p287) target = $region48
        $region47: #{tpu_custom_call.1} parent=35 // pred_region
          %290 = dma.done [#allocation6], 2048
        $region48: #{tpu_custom_call.1} parent=35 // pred_fallthru
          _
        // Predicated region
        $region49: #{tpu_custom_call.1} parent=35 // pred_check
          %p291 = pneg %p113
        $region50: #{tpu_custom_call.1} parent=35 // pred_check_branch
          %293 = sbr.rel (%p291) target = $region52
        $region51: #{tpu_custom_call.1} parent=35 // pred_region
          %294 = dma.done [#allocation9], 2048
        $region52: #{tpu_custom_call.1} parent=35 // pred_fallthru
          _
        %s295 = sand.u32 %s37, 1
        %s296 = scalar_lea.sflag [#allocation3], %s295
        %s297 = sand.u32 %s37, 1
        %s298 = smul.addr %s297, 8
        %s299 = scalar_lea.vmem [#allocation2], %s298
        %p300 = pneg %p50
        %p301 = pneg %p47
        %p302 = pneg %p71
        %p303 = pneg %p68
        %p304 = pneg %p92
        %p305 = pneg %p89
        %p306 = pneg %p113
        %p307 = pneg %p110
        %p308 = pneg %p139
        %p309 = pneg %p136
        %s310 = sand.u32 %s126, 1
        %s311 = scalar_lea.sflag [#allocation4], %s310
        %s312 = sand.u32 %s126, 1
        %s313 = smul.addr %s312, 8
        %s314 = scalar_lea.vmem [#allocation10], %s313
        %p315 = pneg %p165
        %p316 = pneg %p162
        %s317 = sand.u32 %s29, 1
        %s318 = scalar_lea.sflag [#allocation12], %s317
        %s319 = sand.u32 %s152, 1
        %s320 = smul.addr %s319, 8
        %s321 = scalar_lea.vmem [#allocation11], %s320
        %p322 = pneg %p191
        %p323 = pneg %p188
        %s324 = sand.u32 %s29, 1
        %s325 = scalar_lea.sflag [#allocation12], %s324
        %s326 = sand.u32 %s178, 1
        %s327 = smul.addr %s326, 8
        %s328 = scalar_lea.vmem [#allocation13], %s327
        %v329 = vld [vmem:[%s278] sm:$0xff]
        %v330 = vld [vmem:[#allocation5] sm:$0xff]
        %v331 = vld [vmem:[#allocation5 + $0x8] sm:$0xff]
        %v332 = vld [vmem:[#allocation5 + $0x10] sm:$0xff]
        %v333 = vld [vmem:[#allocation5 + $0x18] sm:$0xff]
        %v334 = vld [vmem:[#allocation5 + $0x20] sm:$0xff]
        %v335 = vld [vmem:[#allocation5 + $0x28] sm:$0xff]
        %v336 = vld [vmem:[#allocation5 + $0x30] sm:$0xff]
        %v337 = vld [vmem:[#allocation5 + $0x38] sm:$0xff]
        %v338 = vld [vmem:[#allocation5 + $0x40] sm:$0xff]
        %v339 = vld [vmem:[#allocation5 + $0x48] sm:$0xff]
        %v340 = vld [vmem:[#allocation5 + $0x50] sm:$0xff]
        %v341 = vld [vmem:[#allocation5 + $0x58] sm:$0xff]
        %v342 = vld [vmem:[#allocation5 + $0x60] sm:$0xff]
        %v343 = vld [vmem:[#allocation5 + $0x68] sm:$0xff]
        %v344 = vld [vmem:[#allocation5 + $0x70] sm:$0xff]
        %v345 = vld [vmem:[#allocation5 + $0x78] sm:$0xff]
        %346 = vmatprep.subr.mxu0 0.0
        %347 = vmatpush1.msra.mxu0 %v345
        %348 = vmatprep.subr.mxu0 0.0
        %349 = vmatpush1.msra.mxu0 %v344
        %350 = vmatprep.subr.mxu0 0.0
        %351 = vmatpush1.msra.mxu0 %v343
        %352 = vmatprep.subr.mxu0 0.0
        %353 = vmatpush1.msra.mxu0 %v342
        %354 = vmatprep.subr.mxu0 0.0
        %355 = vmatpush1.msra.mxu0 %v341
        %356 = vmatprep.subr.mxu0 0.0
        %357 = vmatpush1.msra.mxu0 %v340
        %358 = vmatprep.subr.mxu0 0.0
        %359 = vmatpush1.msra.mxu0 %v339
        %360 = vmatprep.subr.mxu0 0.0
        %361 = vmatpush1.msra.mxu0 %v338
        %362 = vmatprep.subr.mxu0 0.0
        %363 = vmatpush1.msra.mxu0 %v337
        %364 = vmatprep.subr.mxu0 0.0
        %365 = vmatpush1.msra.mxu0 %v336
        %366 = vmatprep.subr.mxu0 0.0
        %367 = vmatpush1.msra.mxu0 %v335
        %368 = vmatprep.subr.mxu0 0.0
        %369 = vmatpush1.msra.mxu0 %v334
        %370 = vmatprep.subr.mxu0 0.0
        %371 = vmatpush1.msra.mxu0 %v333
        %372 = vmatprep.subr.mxu0 0.0
        %373 = vmatpush1.msra.mxu0 %v332
        %374 = vmatprep.subr.mxu0 0.0
        %375 = vmatpush1.msra.mxu0 %v331
        %376 = vmatprep.subr.mxu0 0.0
        %377 = vmatpush1.msra.mxu0 %v330
        %378 = vmatprep.subr.mxu0 0.0
        %379 = vmatpush2.msra.mxu0 0.0
        %380 = vmatprep.subr.mxu0 0.0
        %381 = vmatpush2.msra.mxu0 0.0
        %382 = vmatprep.subr.mxu0 0.0
        %383 = vmatpush2.msra.mxu0 0.0
        %384 = vmatprep.subr.mxu0 0.0
        %385 = vmatpush2.msra.mxu0 0.0
        %386 = vmatprep.subr.mxu0 0.0
        %387 = vmatpush2.msra.mxu0 0.0
        %388 = vmatprep.subr.mxu0 0.0
        %389 = vmatpush2.msra.mxu0 0.0
        %390 = vmatprep.subr.mxu0 0.0
        %391 = vmatpush2.msra.mxu0 0.0
        %392 = vmatprep.subr.mxu0 0.0
        %393 = vmatpush2.msra.mxu0 0.0
        %394 = vmatprep.subr.mxu0 0.0
        %395 = vmatpush2.msra.mxu0 0.0
        %396 = vmatprep.subr.mxu0 0.0
        %397 = vmatpush2.msra.mxu0 0.0
        %398 = vmatprep.subr.mxu0 0.0
        %399 = vmatpush2.msra.mxu0 0.0
        %400 = vmatprep.subr.mxu0 0.0
        %401 = vmatpush2.msra.mxu0 0.0
        %402 = vmatprep.subr.mxu0 0.0
        %403 = vmatpush2.msra.mxu0 0.0
        %404 = vmatprep.subr.mxu0 0.0
        %405 = vmatpush2.msra.mxu0 0.0
        %406 = vmatprep.subr.mxu0 0.0
        %407 = vmatpush2.msra.mxu0 0.0
        %408 = vmatprep.subr.mxu0 0.0
        %409 = vmatpush2.msra.mxu0 0.0
        %410 = vmatprep.mubr.f32.mxu0 0.0
        %411 = vmatmul.mubr.f32.gmra.mxu0 %v329
        %v412 = vpop.f32.mrf.mxu0
        %v413 = vadd.f32 0.0, %v412
        %v414 = vpop.f32.mrf.mxu0
        %415 = vdwg.mxu0
        %416 = vst [vmem:[%s314] sm:$0xff] %v413
        %v417 = vld [vmem:[#allocation7] sm:$0xff]
        %v418 = vld [vmem:[#allocation7 + $0x8] sm:$0xff]
        %v419 = vld [vmem:[#allocation7 + $0x10] sm:$0xff]
        %v420 = vld [vmem:[#allocation7 + $0x18] sm:$0xff]
        %v421 = vld [vmem:[#allocation7 + $0x20] sm:$0xff]
        %v422 = vld [vmem:[#allocation7 + $0x28] sm:$0xff]
        %v423 = vld [vmem:[#allocation7 + $0x30] sm:$0xff]
        %v424 = vld [vmem:[#allocation7 + $0x38] sm:$0xff]
        %v425 = vld [vmem:[#allocation7 + $0x40] sm:$0xff]
        %v426 = vld [vmem:[#allocation7 + $0x48] sm:$0xff]
        %v427 = vld [vmem:[#allocation7 + $0x50] sm:$0xff]
        %v428 = vld [vmem:[#allocation7 + $0x58] sm:$0xff]
        %v429 = vld [vmem:[#allocation7 + $0x60] sm:$0xff]
        %v430 = vld [vmem:[#allocation7 + $0x68] sm:$0xff]
        %v431 = vld [vmem:[#allocation7 + $0x70] sm:$0xff]
        %v432 = vld [vmem:[#allocation7 + $0x78] sm:$0xff]
        %433 = vmatprep.subr.mxu0 0.0
        %434 = vmatpush1.msra.mxu0 %v432
        %435 = vmatprep.subr.mxu0 0.0
        %436 = vmatpush1.msra.mxu0 %v431
        %437 = vmatprep.subr.mxu0 0.0
        %438 = vmatpush1.msra.mxu0 %v430
        %439 = vmatprep.subr.mxu0 0.0
        %440 = vmatpush1.msra.mxu0 %v429
        %441 = vmatprep.subr.mxu0 0.0
        %442 = vmatpush1.msra.mxu0 %v428
        %443 = vmatprep.subr.mxu0 0.0
        %444 = vmatpush1.msra.mxu0 %v427
        %445 = vmatprep.subr.mxu0 0.0
        %446 = vmatpush1.msra.mxu0 %v426
        %447 = vmatprep.subr.mxu0 0.0
        %448 = vmatpush1.msra.mxu0 %v425
        %449 = vmatprep.subr.mxu0 0.0
        %450 = vmatpush1.msra.mxu0 %v424
        %451 = vmatprep.subr.mxu0 0.0
        %452 = vmatpush1.msra.mxu0 %v423
        %453 = vmatprep.subr.mxu0 0.0
        %454 = vmatpush1.msra.mxu0 %v422
        %455 = vmatprep.subr.mxu0 0.0
        %456 = vmatpush1.msra.mxu0 %v421
        %457 = vmatprep.subr.mxu0 0.0
        %458 = vmatpush1.msra.mxu0 %v420
        %459 = vmatprep.subr.mxu0 0.0
        %460 = vmatpush1.msra.mxu0 %v419
        %461 = vmatprep.subr.mxu0 0.0
        %462 = vmatpush1.msra.mxu0 %v418
        %463 = vmatprep.subr.mxu0 0.0
        %464 = vmatpush1.msra.mxu0 %v417
        %465 = vmatprep.subr.mxu0 0.0
        %466 = vmatpush2.msra.mxu0 0.0
        %467 = vmatprep.subr.mxu0 0.0
        %468 = vmatpush2.msra.mxu0 0.0
        %469 = vmatprep.subr.mxu0 0.0
        %470 = vmatpush2.msra.mxu0 0.0
        %471 = vmatprep.subr.mxu0 0.0
        %472 = vmatpush2.msra.mxu0 0.0
        %473 = vmatprep.subr.mxu0 0.0
        %474 = vmatpush2.msra.mxu0 0.0
        %475 = vmatprep.subr.mxu0 0.0
        %476 = vmatpush2.msra.mxu0 0.0
        %477 = vmatprep.subr.mxu0 0.0
        %478 = vmatpush2.msra.mxu0 0.0
        %479 = vmatprep.subr.mxu0 0.0
        %480 = vmatpush2.msra.mxu0 0.0
        %481 = vmatprep.subr.mxu0 0.0
        %482 = vmatpush2.msra.mxu0 0.0
        %483 = vmatprep.subr.mxu0 0.0
        %484 = vmatpush2.msra.mxu0 0.0
        %485 = vmatprep.subr.mxu0 0.0
        %486 = vmatpush2.msra.mxu0 0.0
        %487 = vmatprep.subr.mxu0 0.0
        %488 = vmatpush2.msra.mxu0 0.0
        %489 = vmatprep.subr.mxu0 0.0
        %490 = vmatpush2.msra.mxu0 0.0
        %491 = vmatprep.subr.mxu0 0.0
        %492 = vmatpush2.msra.mxu0 0.0
        %493 = vmatprep.subr.mxu0 0.0
        %494 = vmatpush2.msra.mxu0 0.0
        %495 = vmatprep.subr.mxu0 0.0
        %496 = vmatpush2.msra.mxu0 0.0
        %497 = vmatprep.mubr.f32.mxu0 0.0
        %498 = vmatmul.mubr.f32.gmra.mxu0 %v329
        %v499 = vpop.f32.mrf.mxu0
        %v500 = vadd.f32 0.0, %v499
        %v501 = vpop.f32.mrf.mxu0
        %502 = vdwg.mxu0
        %503 = vst [vmem:[%s321] sm:$0xff] %v500
        %v504 = vld [vmem:[#allocation8] sm:$0xff]
        %v505 = vld [vmem:[#allocation8 + $0x8] sm:$0xff]
        %v506 = vld [vmem:[#allocation8 + $0x10] sm:$0xff]
        %v507 = vld [vmem:[#allocation8 + $0x18] sm:$0xff]
        %v508 = vld [vmem:[#allocation8 + $0x20] sm:$0xff]
        %v509 = vld [vmem:[#allocation8 + $0x28] sm:$0xff]
        %v510 = vld [vmem:[#allocation8 + $0x30] sm:$0xff]
        %v511 = vld [vmem:[#allocation8 + $0x38] sm:$0xff]
        %v512 = vld [vmem:[#allocation8 + $0x40] sm:$0xff]
        %v513 = vld [vmem:[#allocation8 + $0x48] sm:$0xff]
        %v514 = vld [vmem:[#allocation8 + $0x50] sm:$0xff]
        %v515 = vld [vmem:[#allocation8 + $0x58] sm:$0xff]
        %v516 = vld [vmem:[#allocation8 + $0x60] sm:$0xff]
        %v517 = vld [vmem:[#allocation8 + $0x68] sm:$0xff]
        %v518 = vld [vmem:[#allocation8 + $0x70] sm:$0xff]
        %v519 = vld [vmem:[#allocation8 + $0x78] sm:$0xff]
        %520 = vmatprep.subr.mxu0 0.0
        %521 = vmatpush1.msra.mxu0 %v519
        %522 = vmatprep.subr.mxu0 0.0
        %523 = vmatpush1.msra.mxu0 %v518
        %524 = vmatprep.subr.mxu0 0.0
        %525 = vmatpush1.msra.mxu0 %v517
        %526 = vmatprep.subr.mxu0 0.0
        %527 = vmatpush1.msra.mxu0 %v516
        %528 = vmatprep.subr.mxu0 0.0
        %529 = vmatpush1.msra.mxu0 %v515
        %530 = vmatprep.subr.mxu0 0.0
        %531 = vmatpush1.msra.mxu0 %v514
        %532 = vmatprep.subr.mxu0 0.0
        %533 = vmatpush1.msra.mxu0 %v513
        %534 = vmatprep.subr.mxu0 0.0
        %535 = vmatpush1.msra.mxu0 %v512
        %536 = vmatprep.subr.mxu0 0.0
        %537 = vmatpush1.msra.mxu0 %v511
        %538 = vmatprep.subr.mxu0 0.0
        %539 = vmatpush1.msra.mxu0 %v510
        %540 = vmatprep.subr.mxu0 0.0
        %541 = vmatpush1.msra.mxu0 %v509
        %542 = vmatprep.subr.mxu0 0.0
        %543 = vmatpush1.msra.mxu0 %v508
        %544 = vmatprep.subr.mxu0 0.0
        %545 = vmatpush1.msra.mxu0 %v507
        %546 = vmatprep.subr.mxu0 0.0
        %547 = vmatpush1.msra.mxu0 %v506
        %548 = vmatprep.subr.mxu0 0.0
        %549 = vmatpush1.msra.mxu0 %v505
        %550 = vmatprep.subr.mxu0 0.0
        %551 = vmatpush1.msra.mxu0 %v504
        %552 = vmatprep.subr.mxu0 0.0
        %553 = vmatpush2.msra.mxu0 0.0
        %554 = vmatprep.subr.mxu0 0.0
        %555 = vmatpush2.msra.mxu0 0.0
        %556 = vmatprep.subr.mxu0 0.0
        %557 = vmatpush2.msra.mxu0 0.0
        %558 = vmatprep.subr.mxu0 0.0
        %559 = vmatpush2.msra.mxu0 0.0
        %560 = vmatprep.subr.mxu0 0.0
        %561 = vmatpush2.msra.mxu0 0.0
        %562 = vmatprep.subr.mxu0 0.0
        %563 = vmatpush2.msra.mxu0 0.0
        %564 = vmatprep.subr.mxu0 0.0
        %565 = vmatpush2.msra.mxu0 0.0
        %566 = vmatprep.subr.mxu0 0.0
        %567 = vmatpush2.msra.mxu0 0.0
        %568 = vmatprep.subr.mxu0 0.0
        %569 = vmatpush2.msra.mxu0 0.0
        %570 = vmatprep.subr.mxu0 0.0
        %571 = vmatpush2.msra.mxu0 0.0
        %572 = vmatprep.subr.mxu0 0.0
        %573 = vmatpush2.msra.mxu0 0.0
        %574 = vmatprep.subr.mxu0 0.0
        %575 = vmatpush2.msra.mxu0 0.0
        %576 = vmatprep.subr.mxu0 0.0
        %577 = vmatpush2.msra.mxu0 0.0
        %578 = vmatprep.subr.mxu0 0.0
        %579 = vmatpush2.msra.mxu0 0.0
        %580 = vmatprep.subr.mxu0 0.0
        %581 = vmatpush2.msra.mxu0 0.0
        %582 = vmatprep.subr.mxu0 0.0
        %583 = vmatpush2.msra.mxu0 0.0
        %584 = vmatprep.mubr.f32.mxu0 0.0
        %585 = vmatmul.mubr.f32.gmra.mxu0 %v329
        %v586 = vpop.f32.mrf.mxu0
        %v587 = vadd.f32 0.0, %v586
        %v588 = vpop.f32.mrf.mxu0
        %589 = vdwg.mxu0
        %590 = vst [vmem:[%s328] sm:$0xff] %v587
        %s591 = sand.u32 %s126, 1
        %s592 = scalar_lea.sflag [#allocation4], %s591
        %s593 = sand.u32 %s126, 1
        %s594 = smul.addr %s593, 8
        %s595 = scalar_lea.vmem [#allocation10], %s594
        %s596 = sand.u32 %s29, 1
        %s597 = scalar_lea.sflag [#allocation12], %s596
        %s598 = sand.u32 %s152, 1
        %s599 = smul.addr %s598, 8
        %s600 = scalar_lea.vmem [#allocation11], %s599
        %s601 = sand.u32 %s29, 1
        %s602 = scalar_lea.sflag [#allocation12], %s601
        %s603 = sand.u32 %s178, 1
        %s604 = smul.addr %s603, 8
        %s605 = scalar_lea.vmem [#allocation13], %s604
        // Predicated region
        $region53: #{tpu_custom_call.1} parent=35 // pred_check
          %p606 = pneg %p136
        $region54: #{tpu_custom_call.1} parent=35 // pred_check_branch
          %608 = sbr.rel (%p606) target = $region56
        $region55: #{tpu_custom_call.1} parent=35 // pred_region
          %s610 = ssub.s32 128, 128
          %611 = vsyncadd %s592, %s610
          %s612 = smul.addr %s29, 128
          %s613 = scalar_lea.hbm %s4, %s612
          %s615 = sshll.u32 %s595, 4
          %s616 = int_to_ptr.vmem [resolvable:$true] %s615
          %618 = dma.vmem_to_hbm [thread:$0]  %s616, 128, %s613, %s592
        $region56: #{tpu_custom_call.1} parent=35 // pred_fallthru
          _
        // Predicated region
        $region57: #{tpu_custom_call.1} parent=35 // pred_check
          %p619 = pneg %p162
        $region58: #{tpu_custom_call.1} parent=35 // pred_check_branch
          %621 = sbr.rel (%p619) target = $region60
        $region59: #{tpu_custom_call.1} parent=35 // pred_region
          %s623 = ssub.s32 128, 128
          %624 = vsyncadd %s597, %s623
          %s625 = smul.addr %s29, 128
          %s626 = scalar_lea.hbm %s5, %s625
          %s628 = sshll.u32 %s600, 4
          %s629 = int_to_ptr.vmem [resolvable:$true] %s628
          %631 = dma.vmem_to_hbm [thread:$0]  %s629, 128, %s626, %s597
        $region60: #{tpu_custom_call.1} parent=35 // pred_fallthru
          _
        // Predicated region
        $region61: #{tpu_custom_call.1} parent=35 // pred_check
          %p632 = pneg %p188
        $region62: #{tpu_custom_call.1} parent=35 // pred_check_branch
          %634 = sbr.rel (%p632) target = $region64
        $region63: #{tpu_custom_call.1} parent=35 // pred_region
          %s636 = ssub.s32 128, 128
          %637 = vsyncadd %s602, %s636
          %s638 = smul.addr %s29, 128
          %s639 = scalar_lea.hbm %s6, %s638
          %s641 = sshll.u32 %s605, 4
          %s642 = int_to_ptr.vmem [resolvable:$true] %s641
          %644 = dma.vmem_to_hbm [thread:$0]  %s642, 128, %s639, %s602
        $region64: #{tpu_custom_call.1} parent=35 // pred_fallthru
          _
      $region36: #{tpu_custom_call.1} parent=5 // pred_fallthru
        _
      %p645 = scmp.le.s32.totalorder 2, %s24
      // Predicated region
      $region65: #{tpu_custom_call.1} parent=5 // pred_check
        %p646 = pneg %p645
      $region66: #{tpu_custom_call.1} parent=5 // pred_check_branch
        %648 = sbr.rel (%p646) target = $region68
      $region67: #{tpu_custom_call.1} parent=5 // pred_region
        %s649 = ssub.s32 %s24, 2
        // Predicated region
        $region69: #{tpu_custom_call.1} parent=67 // pred_check
          %p650 = pneg %p142
        $region70: #{tpu_custom_call.1} parent=67 // pred_check_branch
          %652 = sbr.rel (%p650) target = $region72
        $region71: #{tpu_custom_call.1} parent=67 // pred_region
          %s653 = sand.u32 %s127, 1
          %s654 = scalar_lea.sflag [#allocation4], %s653
          %s655 = sand.u32 %s127, 1
          %s656 = smul.addr %s655, 8
          %s657 = scalar_lea.vmem [#allocation10], %s656
          %658 = dma.done %s654, 128
        $region72: #{tpu_custom_call.1} parent=67 // pred_fallthru
          _
        // Predicated region
        $region73: #{tpu_custom_call.1} parent=67 // pred_check
          %p659 = pneg %p168
        $region74: #{tpu_custom_call.1} parent=67 // pred_check_branch
          %661 = sbr.rel (%p659) target = $region76
        $region75: #{tpu_custom_call.1} parent=67 // pred_region
          %s662 = sand.u32 %s30, 1
          %s663 = scalar_lea.sflag [#allocation12], %s662
          %s664 = sand.u32 %s153, 1
          %s665 = smul.addr %s664, 8
          %s666 = scalar_lea.vmem [#allocation11], %s665
          %667 = dma.done %s663, 128
        $region76: #{tpu_custom_call.1} parent=67 // pred_fallthru
          _
        // Predicated region
        $region77: #{tpu_custom_call.1} parent=67 // pred_check
          %p668 = pneg %p194
        $region78: #{tpu_custom_call.1} parent=67 // pred_check_branch
          %670 = sbr.rel (%p668) target = $region80
        $region79: #{tpu_custom_call.1} parent=67 // pred_region
          %s671 = sand.u32 %s30, 1
          %s672 = scalar_lea.sflag [#allocation12], %s671
          %s673 = sand.u32 %s179, 1
          %s674 = smul.addr %s673, 8
          %s675 = scalar_lea.vmem [#allocation13], %s674
          %676 = dma.done %s672, 128
        $region80: #{tpu_custom_call.1} parent=67 // pred_fallthru
          _
      $region68: #{tpu_custom_call.1} parent=5 // pred_fallthru
        _
    $region6: #{tpu_custom_call.1} parent=1 // loop_footer
      %s28 = sadd.s32 1, %s24
    $region7: #{tpu_custom_call.1} parent=1 // loop_footer_branch
      %23 = sbr.rel target = $region3
    $region8: #{tpu_custom_call.1} parent=1 // loop_exit
      _
    %677 = vsyncpa [#allocation3], 1
    %s678 = scalar_lea.sflag [#allocation3], 1
    %679 = vsyncpa %s678, 1
    %680 = vsyncpa [#allocation6], 1
    %681 = vsyncpa [#allocation9], 1
    %682 = vsyncpa [#allocation4], 1
    %s683 = scalar_lea.sflag [#allocation4], 1
    %684 = vsyncpa %s683, 1
    %685 = vsyncpa [#allocation12], 1
    %s686 = scalar_lea.sflag [#allocation12], 1
    %687 = vsyncpa %s686, 1

</llo_original>
